<compile_context>
chip_gen: v6e
topology: v6e:2x2x1
jax: 0.10.0
libtpu: 0.0.40
codegen_flags: <defaults>
</compile_context>

<pallas_src>
import jax
import jax.numpy as jnp
import numpy as np
from jax.experimental import pallas as pl
from jax.experimental.pallas import tpu as pltpu


# ----------------------------------------------------------------------------
# Bilinear weights (PyTorch align_corners=False semantics)
# ----------------------------------------------------------------------------
def _bilinear_weight_matrix(out_size: int, in_size: int) -> jnp.ndarray:
    """Row-stochastic (out_size, in_size) matrix reproducing PyTorch's bilinear
    interpolation with align_corners=False (half-pixel centers)."""
    scale = in_size / out_size
    dst = jnp.arange(out_size, dtype=jnp.float32)
    src = (dst + 0.5) * scale - 0.5
    src = jnp.maximum(src, 0.0)                      # PyTorch clamps negatives to 0
    i0 = jnp.clip(jnp.floor(src).astype(jnp.int32), 0, in_size - 1)
    i1 = jnp.clip(i0 + 1, 0, in_size - 1)
    lam = src - i0.astype(jnp.float32)
    w = (jax.nn.one_hot(i0, in_size, dtype=jnp.float32) * (1.0 - lam)[:, None]
         + jax.nn.one_hot(i1, in_size, dtype=jnp.float32) * lam[:, None])
    return w


# ----------------------------------------------------------------------------
# Kernels
# ----------------------------------------------------------------------------
def _rows_matmul_kernel(w_ref, x_ref, o_ref):
    # w: (K, M) resident weight block; x: (rows, K); o: (rows, M).
    o_ref[...] = jnp.dot(
        x_ref[...], w_ref[...], preferred_element_type=jnp.float32
    ).astype(o_ref.dtype)


def _h_resize_kernel(wh_ref, x_ref, o_ref):
    # wh: (H_out, H_in); x: (1, H_in, W_out); o: (1, H_out, W_out).
    o_ref[0] = jnp.dot(
        wh_ref[...], x_ref[0], preferred_element_type=jnp.float32
    ).astype(o_ref.dtype)


# ----------------------------------------------------------------------------
# Sizing helpers
# ----------------------------------------------------------------------------
def _round_up(v: int, m: int) -> int:
    return (v + m - 1) // m * m


def _vmem_limit_bytes() -> int:
    """Scoped VMEM limit derived from the chip's physical capacity."""
    try:
        cap = int(pltpu.get_tpu_info().vmem_capacity_bytes)
    except Exception:
        cap = 64 * 1024 * 1024          # conservative: v7x per-TC VMEM
    # ~70% of physical, capped, leaves headroom for compiler scratch.
    return int(min(int(cap * 0.7), 100 * 1024 * 1024))


def _pick_block_rows(n_rows: int, bytes_per_row: int, avail_bytes: int) -> int:
    """Rows (sublane axis) per grid step: a multiple of 8 (or the full extent),
    sized so double-buffered input+output blocks fit in `avail_bytes`."""
    per_row = 2 * max(bytes_per_row, 1)                       # in + out, double-buffered
    cap = max(8, (max(avail_bytes, 0) // per_row) // 8 * 8)
    if n_rows <= 8 or (n_rows < 16 and n_rows <= cap):
        return n_rows                                         # single full block
    if n_rows <= cap:
        # Everything fits in one block: split into two so the "parallel" grid
        # can shard across v7x's two TensorCores (negligible cost on v5e/v6e).
        return _round_up(pl.cdiv(n_rows, 2), 8)
    return cap                                                # last block may be partial


# ----------------------------------------------------------------------------
# Dense (Kronecker-weight) path
# ----------------------------------------------------------------------------
def _dense_resize_call(x2d, w2t, bnc, vmem_limit, *, single_buffer_weight):
    nc, hw_in = x2d.shape
    hw_out = w2t.shape[1]
    if single_buffer_weight:
        # Constant index_map -> the block is never re-fetched; one pipeline
        # buffer is enough (halves the weight's VMEM footprint).
        w_spec = pl.BlockSpec((hw_in, hw_out), lambda i: (0, 0),
                              pipeline_mode=pl.Buffered(1))
    else:
        w_spec = pl.BlockSpec((hw_in, hw_out), lambda i: (0, 0))
    return pl.pallas_call(
        _rows_matmul_kernel,
        out_shape=jax.ShapeDtypeStruct((nc, hw_out), x2d.dtype),
        grid_spec=pltpu.PrefetchScalarGridSpec(
            num_scalar_prefetch=0,
            grid=(pl.cdiv(nc, bnc),),
            in_specs=[w_spec,
                      pl.BlockSpec((bnc, hw_in), lambda i: (i, 0))],
            out_specs=pl.BlockSpec((bnc, hw_out), lambda i: (i, 0)),
        ),
        compiler_params=pltpu.CompilerParams(
            dimension_semantics=("parallel",),
            vmem_limit_bytes=vmem_limit,
        ),
    )(w2t, x2d)


# ----------------------------------------------------------------------------
# Separable two-pass fallback (large spatial sizes)
# ----------------------------------------------------------------------------
def _separable_resize(x, wh, ww, w_dtype, vmem_limit):
    n, c, h_in, w_in = x.shape
    h_out, w_out = wh.shape[0], ww.shape[0]
    nc = n * c
    itemsize = np.dtype(x.dtype).itemsize
    w_itemsize = np.dtype(w_dtype).itemsize

    # Pass A (resize along W): (N*C*H_in, W_in) @ Ww^T -> (N*C*H_in, W_out).
    rows_a = nc * h_in
    xa = x.reshape(rows_a, w_in)                              # free view
    wwt = ww.T.astype(w_dtype)                                # (W_in, W_out)
    avail_a = vmem_limit - 2 * w_in * w_out * w_itemsize
    bra = _pick_block_rows(rows_a, (w_in + w_out) * itemsize, avail_a)
    ya = pl.pallas_call(
        _rows_matmul_kernel,
        out_shape=jax.ShapeDtypeStruct((rows_a, w_out), x.dtype),
        grid_spec=pltpu.PrefetchScalarGridSpec(
            num_scalar_prefetch=0,
            grid=(pl.cdiv(rows_a, bra),),
            in_specs=[pl.BlockSpec((w_in, w_out), lambda i: (0, 0)),
                      pl.BlockSpec((bra, w_in), lambda i: (i, 0))],
            out_specs=pl.BlockSpec((bra, w_out), lambda i: (i, 0)),
        ),
        compiler_params=pltpu.CompilerParams(
            dimension_semantics=("parallel",),
            vmem_limit_bytes=vmem_limit,
        ),
    )(wwt, xa)

    # Pass B (resize along H): one (H_in, W_out) slab per (n, c) sample.
    # TODO(synk): for spatial sizes where even one slab exceeds VMEM, add a
    # K-tiled (H_in) accumulator variant instead of requiring a full slab.
    yb = ya.reshape(nc, h_in, w_out)                          # free view
    whc = wh.astype(w_dtype)                                  # (H_out, H_in)
    out = pl.pallas_call(
        _h_resize_kernel,
        out_shape=jax.ShapeDtypeStruct((nc, h_out, w_out), x.dtype),
        grid_spec=pltpu.PrefetchScalarGridSpec(
            num_scalar_prefetch=0,
            grid=(nc,),
            in_specs=[pl.BlockSpec((h_out, h_in), lambda i: (0, 0)),
                      pl.BlockSpec((1, h_in, w_out), lambda i: (i, 0, 0))],
            out_specs=pl.BlockSpec((1, h_out, w_out), lambda i: (i, 0, 0)),
        ),
        compiler_params=pltpu.CompilerParams(
            dimension_semantics=("parallel",),
            vmem_limit_bytes=vmem_limit,
        ),
    )(whc, yb)
    return out.reshape(n, c, h_out, w_out)


# ----------------------------------------------------------------------------
# Public wrapper == Sample(width, height).forward
# ----------------------------------------------------------------------------
def bilinear_resize(x: jnp.ndarray, width: int, height: int) -> jnp.ndarray:
    """Equivalent of Sample(width, height).forward(x) for NCHW `x`.

    nn.Upsample(size=(width, height)) interprets size as (H_out, W_out), so the
    output spatial shape is (width, height) — matching the PyTorch module."""
    n, c, h_in, w_in = x.shape
    h_out, w_out = int(width), int(height)
    nc, hw_in, hw_out = n * c, h_in * w_in, h_out * w_out

    # Native MXU dtype for sub-f32 floats (half DMA bytes / VMEM); f32 otherwise.
    w_dtype = x.dtype if x.dtype in (jnp.bfloat16, jnp.float16) else jnp.float32
    itemsize = np.dtype(x.dtype).itemsize
    w_itemsize = np.dtype(w_dtype).itemsize

    wh = _bilinear_weight_matrix(h_out, h_in)                 # (H_out, H_in)
    ww = _bilinear_weight_matrix(w_out, w_in)                 # (W_out, W_in)

    vmem_limit = _vmem_limit_bytes()
    w2_bytes = hw_in * hw_out * w_itemsize
    row_bytes = (hw_in + hw_out) * itemsize                   # one N*C row of x + out

    # Dense path only when the resident Kronecker weight (budgeted at 2x in
    # case single-buffering is unavailable) plus a minimal row block fits, and
    # the dense matmul is not grossly compute-wasteful (W2 has <=4 nnz/row).
    dense_fits = 2 * w2_bytes + 2 * 8 * row_bytes <= int(0.9 * vmem_limit)
    if dense_fits and hw_in <= 4096:
        # W2^T[(hi,wi),(ho,wo)] = Wh[ho,hi] * Ww[wo,wi]
        w2t = (wh.T[:, None, :, None] * ww.T[None, :, None, :]) \
            .reshape(hw_in, hw_out).astype(w_dtype)
        x2d = x.reshape(nc, hw_in)                            # free view of NCHW
        avail = max(vmem_limit - 2 * w2_bytes, 0)
        bnc = _pick_block_rows(nc, row_bytes, avail)
        try:
            out2d = _dense_resize_call(x2d, w2t, bnc, vmem_limit,
                                       single_buffer_weight=True)
        except Exception:
            # pl.Buffered(1) not accepted on this jax build; default buffering.
            out2d = _dense_resize_call(x2d, w2t, bnc, vmem_limit,
                                       single_buffer_weight=False)
        return out2d.reshape(n, c, h_out, w_out)              # free view

    # Two-pass separable fallback: ~order-of-magnitude fewer flops and KB-scale
    # resident weights (needed when W2 would blow VMEM; preferred on v5e for
    # large spatial sizes where the dense matmul goes compute-bound).
    return _separable_resize(x, wh, ww, w_dtype, vmem_limit)


if __name__ == "__main__":
    key = jax.random.PRNGKey(0)
    N, C, H_in, W_in = 2, 4, 16, 16
    width, height = 8, 24                                     # Upsample size = (H_out, W_out)

    x = jax.random.normal(key, (N, C, H_in, W_in), dtype=jnp.float32)

    out = jax.block_until_ready(bilinear_resize(x, width, height))

    # Reference: same separable bilinear formulation in plain JAX.
    wh = _bilinear_weight_matrix(width, H_in)
    ww = _bilinear_weight_matrix(height, W_in)
    ref = jnp.einsum('oh,nchw,pw->ncop', wh, x, ww)
    assert out.shape == (N, C, width, height)
    assert jnp.allclose(out, ref, atol=1e-4, rtol=1e-4), \
        float(jnp.max(jnp.abs(out - ref)))

    print("KERNEL_OK")
</pallas_src>

<mosaic_0001>
module attributes {stable_mosaic.version = 11 : i64} {
  func.func @_rows_matmul_kernel(%arg0: i32, %arg1: memref<256x192xf32, #tpu.memory_space<vmem>>, %arg2: memref<8x256xf32, #tpu.memory_space<vmem>>, %arg3: memref<8x192xf32, #tpu.memory_space<vmem>>) attributes {dimension_semantics = [#tpu.dimension_semantics<parallel>], iteration_bounds = array<i64: 1>, scalar_prefetch = 0 : i64, scratch_operands = 0 : i64, tpu.core_type = #tpu.core_type<tc>, window_params = [{pipeline_mode = #tpu.pipeline_mode<synchronous>, transform_indices = @transform_0, window_bounds = array<i64: 256, 192>}, {transform_indices = @transform_1, window_bounds = array<i64: 8, 256>}, {transform_indices = @transform_2, window_bounds = array<i64: 8, 192>}]} {
    %c0 = arith.constant 0 : index
    %c0_0 = arith.constant 0 : index
    %0 = vector.load %arg2[%c0, %c0_0] : memref<8x256xf32, #tpu.memory_space<vmem>>, vector<8x256xf32>
    %c0_1 = arith.constant 0 : index
    %c0_2 = arith.constant 0 : index
    %1 = vector.load %arg1[%c0_1, %c0_2] : memref<256x192xf32, #tpu.memory_space<vmem>>, vector<256x192xf32>
    %cst = arith.constant dense<0.000000e+00> : vector<8x192xf32>
    %2 = tpu.matmul %0, %1, %cst {dimension_numbers = #tpu.dot_dimension_numbers<[1], [0], [0], [1], [0, 0, 1, 1], [], []>} : vector<8x256xf32>, vector<256x192xf32>, vector<8x192xf32> -> vector<8x192xf32>
    %c0_3 = arith.constant 0 : index
    %c0_4 = arith.constant 0 : index
    %3 = vector.load %arg3[%c0_3, %c0_4] : memref<8x192xf32, #tpu.memory_space<vmem>>, vector<8x192xf32>
    tpu.vector_store %arg3[%c0_3, %c0_4], %2 {strides = array<i32>} : memref<8x192xf32, #tpu.memory_space<vmem>>, vector<8x192xf32>,
    return
  }
  func.func @transform_0(%arg0: i32) -> (i32, i32) {
    %c0_i32 = arith.constant 0 : i32
    %c0_i32_0 = arith.constant 0 : i32
    %c0_i32_1 = arith.constant 0 : i32
    return %c0_i32, %c0_i32_0 : i32, i32
  }
  func.func @transform_1(%arg0: i32) -> (i32, i32) {
    %c0_i32 = arith.constant 0 : i32
    %c0_i32_0 = arith.constant 0 : i32
    return %arg0, %c0_i32 : i32, i32
  }
  func.func @transform_2(%arg0: i32) -> (i32, i32) {
    %c0_i32 = arith.constant 0 : i32
    %c0_i32_0 = arith.constant 0 : i32
    return %arg0, %c0_i32 : i32, i32
  }
}

module attributes {stable_mosaic.version = 11 : i64} {
  func.func @_rows_matmul_kernel(%arg0: i32, %arg1: memref<256x192xf32, #tpu.memory_space<vmem>>, %arg2: memref<8x256xf32, #tpu.memory_space<vmem>>, %arg3: memref<8x192xf32, #tpu.memory_space<vmem>>) attributes {dimension_semantics = [#tpu.dimension_semantics<parallel>], iteration_bounds = array<i64: 1>, scalar_prefetch = 0 : i64, scratch_operands = 0 : i64, tpu.core_type = #tpu.core_type<tc>, window_params = [{pipeline_mode = #tpu.pipeline_mode<synchronous>, transform_indices = @transform_0, window_bounds = array<i64: 256, 192>}, {transform_indices = @transform_1, window_bounds = array<i64: 8, 256>}, {transform_indices = @transform_2, window_bounds = array<i64: 8, 192>}]} {
    %c0 = arith.constant 0 : index
    %c0_0 = arith.constant 0 : index
    %0 = vector.load %arg2[%c0, %c0_0] : memref<8x256xf32, #tpu.memory_space<vmem>>, vector<8x256xf32>
    %c0_1 = arith.constant 0 : index
    %c0_2 = arith.constant 0 : index
    %1 = vector.load %arg1[%c0_1, %c0_2] : memref<256x192xf32, #tpu.memory_space<vmem>>, vector<256x192xf32>
    %cst = arith.constant dense<0.000000e+00> : vector<8x192xf32>
    %2 = tpu.matmul %0, %1, %cst {dimension_numbers = #tpu.dot_dimension_numbers<[1], [0], [0], [1], [0, 0, 1, 1], [], []>} : vector<8x256xf32>, vector<256x192xf32>, vector<8x192xf32> -> vector<8x192xf32>
    %c0_3 = arith.constant 0 : index
    %c0_4 = arith.constant 0 : index
    %3 = vector.load %arg3[%c0_3, %c0_4] : memref<8x192xf32, #tpu.memory_space<vmem>>, vector<8x192xf32>
    tpu.vector_store %arg3[%c0_3, %c0_4], %2 {strides = array<i32>} : memref<8x192xf32, #tpu.memory_space<vmem>>, vector<8x192xf32>,
    return
  }
  func.func @transform_0(%arg0: i32) -> (i32, i32) {
    %c0_i32 = arith.constant 0 : i32
    %c0_i32_0 = arith.constant 0 : i32
    %c0_i32_1 = arith.constant 0 : i32
    return %c0_i32, %c0_i32_0 : i32, i32
  }
  func.func @transform_1(%arg0: i32) -> (i32, i32) {
    %c0_i32 = arith.constant 0 : i32
    %c0_i32_0 = arith.constant 0 : i32
    return %arg0, %c0_i32 : i32, i32
  }
  func.func @transform_2(%arg0: i32) -> (i32, i32) {
    %c0_i32 = arith.constant 0 : i32
    %c0_i32_0 = arith.constant 0 : i32
    return %arg0, %c0_i32 : i32, i32
  }
}

</mosaic_0001>

<llo_original>
// kernel: tpu_custom_call.1
$region0: #{tpu_custom_call.1}
  #allocation0 [shape = 'u32[]', space=smem, size = 0x4, offset = 0x4, fixed_abs, tag = 'smem constant byte address 0x4 - core index']
  #allocation1 [shape = 'u32[144,128]{1,0:T(1,128)}', space=vmem, size = 0x12000, scoped, tag = 'internal scratch']
  %s0 = inlined_call_operand.vmem [shape: f32[256,192], index: 0, kind: input, shape index: {}]
  %s1 = inlined_call_operand.vmem [shape: f32[8,256], index: 1, kind: input, shape index: {}]
  %s2 = inlined_call_operand.hbm [shape: f32[8,192], index: 2, kind: output, shape index: {}]
  %s3 = sld [smem:[#allocation0]]
  $region18: #{tpu_custom_call.1} parent=0
    _
  %s5 = ssub.s32 1, %s3
  %s6 = scalar_select 0, %s5, %s3
  $region1: #{tpu_custom_call.1} parent=0
    #allocation2 [shape = 'u8[8192]{0}', space=vmem, size = 0x2000, scoped, tag = 'output window, operand 0, single buffered']
    #allocation3 [shape = 's32[1]{0}', space=sflag, size = 0x4, scoped, tag = 'scoped memory for tpu_custom_call.1']
    %7 = vsyncpa [#allocation3], 0
    // Predicated region
    $region2: #{tpu_custom_call.1} parent=1 // pred_check
      _
    $region3: #{tpu_custom_call.1} parent=1 // pred_check_branch
      %9 = sbr.rel (0) target = $region5
    $region4: #{tpu_custom_call.1} parent=1 // pred_region
      _
    $region5: #{tpu_custom_call.1} parent=1 // pred_fallthru
      _
    // Predicated region
    $region6: #{tpu_custom_call.1} parent=1 // pred_check
      _
    $region7: #{tpu_custom_call.1} parent=1 // pred_check_branch
      %11 = sbr.rel (0) target = $region9
    $region8: #{tpu_custom_call.1} parent=1 // pred_region
      _
    $region9: #{tpu_custom_call.1} parent=1 // pred_fallthru
      _
    %v12 = vld [vmem:[%s1] sm:$0xff]
    %v13 = vld [vmem:[%s1 + $0x8] sm:$0xff]
    %v14 = vld [vmem:[%s0] sm:$0xff]
    %v15 = vld [vmem:[%s0 + $0x8] sm:$0xff]
    %v16 = vld [vmem:[%s0 + $0x10] sm:$0xff]
    %v17 = vld [vmem:[%s0 + $0x18] sm:$0xff]
    %v18 = vld [vmem:[%s0 + $0x20] sm:$0xff]
    %v19 = vld [vmem:[%s0 + $0x28] sm:$0xff]
    %v20 = vld [vmem:[%s0 + $0x30] sm:$0xff]
    %v21 = vld [vmem:[%s0 + $0x38] sm:$0xff]
    %v22 = vld [vmem:[%s0 + $0x40] sm:$0xff]
    %v23 = vld [vmem:[%s0 + $0x48] sm:$0xff]
    %v24 = vld [vmem:[%s0 + $0x50] sm:$0xff]
    %v25 = vld [vmem:[%s0 + $0x58] sm:$0xff]
    %v26 = vld [vmem:[%s0 + $0x60] sm:$0xff]
    %v27 = vld [vmem:[%s0 + $0x68] sm:$0xff]
    %v28 = vld [vmem:[%s0 + $0x70] sm:$0xff]
    %v29 = vld [vmem:[%s0 + $0x78] sm:$0xff]
    %v30 = vld [vmem:[%s0 + $0x80] sm:$0xff]
    %v31 = vld [vmem:[%s0 + $0x88] sm:$0xff]
    %v32 = vld [vmem:[%s0 + $0x90] sm:$0xff]
    %v33 = vld [vmem:[%s0 + $0x98] sm:$0xff]
    %v34 = vld [vmem:[%s0 + $0xa0] sm:$0xff]
    %v35 = vld [vmem:[%s0 + $0xa8] sm:$0xff]
    %v36 = vld [vmem:[%s0 + $0xb0] sm:$0xff]
    %v37 = vld [vmem:[%s0 + $0xb8] sm:$0xff]
    %v38 = vld [vmem:[%s0 + $0xc0] sm:$0xff]
    %v39 = vld [vmem:[%s0 + $0xc8] sm:$0xff]
    %v40 = vld [vmem:[%s0 + $0xd0] sm:$0xff]
    %v41 = vld [vmem:[%s0 + $0xd8] sm:$0xff]
    %v42 = vld [vmem:[%s0 + $0xe0] sm:$0xff]
    %v43 = vld [vmem:[%s0 + $0xe8] sm:$0xff]
    %v44 = vld [vmem:[%s0 + $0xf0] sm:$0xff]
    %v45 = vld [vmem:[%s0 + $0xf8] sm:$0xff]
    %v46 = vld [vmem:[%s0 + $0x100] sm:$0xff]
    %v47 = vld [vmem:[%s0 + $0x108] sm:$0xff]
    %v48 = vld [vmem:[%s0 + $0x110] sm:$0xff]
    %v49 = vld [vmem:[%s0 + $0x118] sm:$0xff]
    %v50 = vld [vmem:[%s0 + $0x120] sm:$0xff]
    %v51 = vld [vmem:[%s0 + $0x128] sm:$0xff]
    %v52 = vld [vmem:[%s0 + $0x130] sm:$0xff]
    %v53 = vld [vmem:[%s0 + $0x138] sm:$0xff]
    %v54 = vld [vmem:[%s0 + $0x140] sm:$0xff]
    %v55 = vld [vmem:[%s0 + $0x148] sm:$0xff]
    %v56 = vld [vmem:[%s0 + $0x150] sm:$0xff]
    %v57 = vld [vmem:[%s0 + $0x158] sm:$0xff]
    %v58 = vld [vmem:[%s0 + $0x160] sm:$0xff]
    %v59 = vld [vmem:[%s0 + $0x168] sm:$0xff]
    %v60 = vld [vmem:[%s0 + $0x170] sm:$0xff]
    %v61 = vld [vmem:[%s0 + $0x178] sm:$0xff]
    %v62 = vld [vmem:[%s0 + $0x180] sm:$0xff]
    %v63 = vld [vmem:[%s0 + $0x188] sm:$0xff]
    %v64 = vld [vmem:[%s0 + $0x190] sm:$0xff]
    %v65 = vld [vmem:[%s0 + $0x198] sm:$0xff]
    %v66 = vld [vmem:[%s0 + $0x1a0] sm:$0xff]
    %v67 = vld [vmem:[%s0 + $0x1a8] sm:$0xff]
    %v68 = vld [vmem:[%s0 + $0x1b0] sm:$0xff]
    %v69 = vld [vmem:[%s0 + $0x1b8] sm:$0xff]
    %v70 = vld [vmem:[%s0 + $0x1c0] sm:$0xff]
    %v71 = vld [vmem:[%s0 + $0x1c8] sm:$0xff]
    %v72 = vld [vmem:[%s0 + $0x1d0] sm:$0xff]
    %v73 = vld [vmem:[%s0 + $0x1d8] sm:$0xff]
    %v74 = vld [vmem:[%s0 + $0x1e0] sm:$0xff]
    %v75 = vld [vmem:[%s0 + $0x1e8] sm:$0xff]
    %v76 = vld [vmem:[%s0 + $0x1f0] sm:$0xff]
    %v77 = vld [vmem:[%s0 + $0x1f8] sm:$0xff]
    %78 = vmatprep.subr.mxu0 %v45
    %79 = vmatpush1.msra.mxu0 %v44
    %80 = vmatprep.subr.mxu0 %v43
    %81 = vmatpush1.msra.mxu0 %v42
    %82 = vmatprep.subr.mxu0 %v41
    %83 = vmatpush1.msra.mxu0 %v40
    %84 = vmatprep.subr.mxu0 %v39
    %85 = vmatpush1.msra.mxu0 %v38
    %86 = vmatprep.subr.mxu0 %v37
    %87 = vmatpush1.msra.mxu0 %v36
    %88 = vmatprep.subr.mxu0 %v35
    %89 = vmatpush1.msra.mxu0 %v34
    %90 = vmatprep.subr.mxu0 %v33
    %91 = vmatpush1.msra.mxu0 %v32
    %92 = vmatprep.subr.mxu0 %v31
    %93 = vmatpush1.msra.mxu0 %v30
    %94 = vmatprep.subr.mxu0 %v29
    %95 = vmatpush1.msra.mxu0 %v28
    %96 = vmatprep.subr.mxu0 %v27
    %97 = vmatpush1.msra.mxu0 %v26
    %98 = vmatprep.subr.mxu0 %v25
    %99 = vmatpush1.msra.mxu0 %v24
    %100 = vmatprep.subr.mxu0 %v23
    %101 = vmatpush1.msra.mxu0 %v22
    %102 = vmatprep.subr.mxu0 %v21
    %103 = vmatpush1.msra.mxu0 %v20
    %104 = vmatprep.subr.mxu0 %v19
    %105 = vmatpush1.msra.mxu0 %v18
    %106 = vmatprep.subr.mxu0 %v17
    %107 = vmatpush1.msra.mxu0 %v16
    %108 = vmatprep.subr.mxu0 %v15
    %109 = vmatpush1.msra.mxu0 %v14
    %110 = vmatprep.subr.mxu0 %v77
    %111 = vmatpush2.msra.mxu0 %v76
    %112 = vmatprep.subr.mxu0 %v75
    %113 = vmatpush2.msra.mxu0 %v74
    %114 = vmatprep.subr.mxu0 %v73
    %115 = vmatpush2.msra.mxu0 %v72
    %116 = vmatprep.subr.mxu0 %v71
    %117 = vmatpush2.msra.mxu0 %v70
    %118 = vmatprep.subr.mxu0 %v69
    %119 = vmatpush2.msra.mxu0 %v68
    %120 = vmatprep.subr.mxu0 %v67
    %121 = vmatpush2.msra.mxu0 %v66
    %122 = vmatprep.subr.mxu0 %v65
    %123 = vmatpush2.msra.mxu0 %v64
    %124 = vmatprep.subr.mxu0 %v63
    %125 = vmatpush2.msra.mxu0 %v62
    %126 = vmatprep.subr.mxu0 %v61
    %127 = vmatpush2.msra.mxu0 %v60
    %128 = vmatprep.subr.mxu0 %v59
    %129 = vmatpush2.msra.mxu0 %v58
    %130 = vmatprep.subr.mxu0 %v57
    %131 = vmatpush2.msra.mxu0 %v56
    %132 = vmatprep.subr.mxu0 %v55
    %133 = vmatpush2.msra.mxu0 %v54
    %134 = vmatprep.subr.mxu0 %v53
    %135 = vmatpush2.msra.mxu0 %v52
    %136 = vmatprep.subr.mxu0 %v51
    %137 = vmatpush2.msra.mxu0 %v50
    %138 = vmatprep.subr.mxu0 %v49
    %139 = vmatpush2.msra.mxu0 %v48
    %140 = vmatprep.subr.mxu0 %v47
    %141 = vmatpush2.msra.mxu0 %v46
    %142 = vmatprep.mubr.f32.mxu0 %v13
    %143 = vmatmul.mubr.f32.gmra.mxu0 %v12
    %v144 = vpop.f32.mrf.mxu0
    %v145 = vadd.f32 0.0, %v144
    %v146 = vpop.f32.mrf.mxu0
    %v147 = vadd.f32 0.0, %v146
    %148 = vdwg.mxu0
    %149 = vst [vmem:[#allocation2] sm:$0xff] %v145
    %vm150 = vcmask 523264
    %151 = vst.msk [vmem:[#allocation2 + $0x8] sm:$0xff] %vm150, %v147
    // Predicated region
    $region10: #{tpu_custom_call.1} parent=1 // pred_check
      _
    $region11: #{tpu_custom_call.1} parent=1 // pred_check_branch
      %153 = sbr.rel (0) target = $region13
    $region12: #{tpu_custom_call.1} parent=1 // pred_region
      %s155 = ssub.s32 256, 256
      %156 = vsyncadd [#allocation3], %s155
      %s158 = sshll.u32 [#allocation2], 4
      %s159 = int_to_ptr.vmem [resolvable:$true] %s158
      %161 = dma.vmem_to_hbm [thread:$0]  %s159, 256, %s2, [#allocation3]
    $region13: #{tpu_custom_call.1} parent=1 // pred_fallthru
      _
    // Predicated region
    $region14: #{tpu_custom_call.1} parent=1 // pred_check
      _
    $region15: #{tpu_custom_call.1} parent=1 // pred_check_branch
      %163 = sbr.rel (0) target = $region17
    $region16: #{tpu_custom_call.1} parent=1 // pred_region
      %164 = dma.done [#allocation3], 256
    $region17: #{tpu_custom_call.1} parent=1 // pred_fallthru
      _
    %165 = vsyncpa [#allocation3], 1

// kernel: tpu_custom_call.1
$region0: #{tpu_custom_call.1}
  #allocation0 [shape = 'u32[]', space=smem, size = 0x4, offset = 0x4, fixed_abs, tag = 'smem constant byte address 0x4 - core index']
  #allocation1 [shape = 'u32[144,128]{1,0:T(1,128)}', space=vmem, size = 0x12000, scoped, tag = 'internal scratch']
  %s0 = inlined_call_operand.vmem [shape: f32[256,192], index: 0, kind: input, shape index: {}]
  %s1 = inlined_call_operand.vmem [shape: f32[8,256], index: 1, kind: input, shape index: {}]
  %s2 = inlined_call_operand.hbm [shape: f32[8,192], index: 2, kind: output, shape index: {}]
  %s3 = sld [smem:[#allocation0]]
  $region18: #{tpu_custom_call.1} parent=0
    _
  %s5 = ssub.s32 1, %s3
  %s6 = scalar_select 0, %s5, %s3
  $region1: #{tpu_custom_call.1} parent=0
    #allocation2 [shape = 'u8[8192]{0}', space=vmem, size = 0x2000, scoped, tag = 'output window, operand 0, single buffered']
    #allocation3 [shape = 's32[1]{0}', space=sflag, size = 0x4, scoped, tag = 'scoped memory for tpu_custom_call.1']
    %7 = vsyncpa [#allocation3], 0
    // Predicated region
    $region2: #{tpu_custom_call.1} parent=1 // pred_check
      _
    $region3: #{tpu_custom_call.1} parent=1 // pred_check_branch
      %9 = sbr.rel (0) target = $region5
    $region4: #{tpu_custom_call.1} parent=1 // pred_region
      _
    $region5: #{tpu_custom_call.1} parent=1 // pred_fallthru
      _
    // Predicated region
    $region6: #{tpu_custom_call.1} parent=1 // pred_check
      _
    $region7: #{tpu_custom_call.1} parent=1 // pred_check_branch
      %11 = sbr.rel (0) target = $region9
    $region8: #{tpu_custom_call.1} parent=1 // pred_region
      _
    $region9: #{tpu_custom_call.1} parent=1 // pred_fallthru
      _
    %v12 = vld [vmem:[%s1] sm:$0xff]
    %v13 = vld [vmem:[%s1 + $0x8] sm:$0xff]
    %v14 = vld [vmem:[%s0] sm:$0xff]
    %v15 = vld [vmem:[%s0 + $0x8] sm:$0xff]
    %v16 = vld [vmem:[%s0 + $0x10] sm:$0xff]
    %v17 = vld [vmem:[%s0 + $0x18] sm:$0xff]
    %v18 = vld [vmem:[%s0 + $0x20] sm:$0xff]
    %v19 = vld [vmem:[%s0 + $0x28] sm:$0xff]
    %v20 = vld [vmem:[%s0 + $0x30] sm:$0xff]
    %v21 = vld [vmem:[%s0 + $0x38] sm:$0xff]
    %v22 = vld [vmem:[%s0 + $0x40] sm:$0xff]
    %v23 = vld [vmem:[%s0 + $0x48] sm:$0xff]
    %v24 = vld [vmem:[%s0 + $0x50] sm:$0xff]
    %v25 = vld [vmem:[%s0 + $0x58] sm:$0xff]
    %v26 = vld [vmem:[%s0 + $0x60] sm:$0xff]
    %v27 = vld [vmem:[%s0 + $0x68] sm:$0xff]
    %v28 = vld [vmem:[%s0 + $0x70] sm:$0xff]
    %v29 = vld [vmem:[%s0 + $0x78] sm:$0xff]
    %v30 = vld [vmem:[%s0 + $0x80] sm:$0xff]
    %v31 = vld [vmem:[%s0 + $0x88] sm:$0xff]
    %v32 = vld [vmem:[%s0 + $0x90] sm:$0xff]
    %v33 = vld [vmem:[%s0 + $0x98] sm:$0xff]
    %v34 = vld [vmem:[%s0 + $0xa0] sm:$0xff]
    %v35 = vld [vmem:[%s0 + $0xa8] sm:$0xff]
    %v36 = vld [vmem:[%s0 + $0xb0] sm:$0xff]
    %v37 = vld [vmem:[%s0 + $0xb8] sm:$0xff]
    %v38 = vld [vmem:[%s0 + $0xc0] sm:$0xff]
    %v39 = vld [vmem:[%s0 + $0xc8] sm:$0xff]
    %v40 = vld [vmem:[%s0 + $0xd0] sm:$0xff]
    %v41 = vld [vmem:[%s0 + $0xd8] sm:$0xff]
    %v42 = vld [vmem:[%s0 + $0xe0] sm:$0xff]
    %v43 = vld [vmem:[%s0 + $0xe8] sm:$0xff]
    %v44 = vld [vmem:[%s0 + $0xf0] sm:$0xff]
    %v45 = vld [vmem:[%s0 + $0xf8] sm:$0xff]
    %v46 = vld [vmem:[%s0 + $0x100] sm:$0xff]
    %v47 = vld [vmem:[%s0 + $0x108] sm:$0xff]
    %v48 = vld [vmem:[%s0 + $0x110] sm:$0xff]
    %v49 = vld [vmem:[%s0 + $0x118] sm:$0xff]
    %v50 = vld [vmem:[%s0 + $0x120] sm:$0xff]
    %v51 = vld [vmem:[%s0 + $0x128] sm:$0xff]
    %v52 = vld [vmem:[%s0 + $0x130] sm:$0xff]
    %v53 = vld [vmem:[%s0 + $0x138] sm:$0xff]
    %v54 = vld [vmem:[%s0 + $0x140] sm:$0xff]
    %v55 = vld [vmem:[%s0 + $0x148] sm:$0xff]
    %v56 = vld [vmem:[%s0 + $0x150] sm:$0xff]
    %v57 = vld [vmem:[%s0 + $0x158] sm:$0xff]
    %v58 = vld [vmem:[%s0 + $0x160] sm:$0xff]
    %v59 = vld [vmem:[%s0 + $0x168] sm:$0xff]
    %v60 = vld [vmem:[%s0 + $0x170] sm:$0xff]
    %v61 = vld [vmem:[%s0 + $0x178] sm:$0xff]
    %v62 = vld [vmem:[%s0 + $0x180] sm:$0xff]
    %v63 = vld [vmem:[%s0 + $0x188] sm:$0xff]
    %v64 = vld [vmem:[%s0 + $0x190] sm:$0xff]
    %v65 = vld [vmem:[%s0 + $0x198] sm:$0xff]
    %v66 = vld [vmem:[%s0 + $0x1a0] sm:$0xff]
    %v67 = vld [vmem:[%s0 + $0x1a8] sm:$0xff]
    %v68 = vld [vmem:[%s0 + $0x1b0] sm:$0xff]
    %v69 = vld [vmem:[%s0 + $0x1b8] sm:$0xff]
    %v70 = vld [vmem:[%s0 + $0x1c0] sm:$0xff]
    %v71 = vld [vmem:[%s0 + $0x1c8] sm:$0xff]
    %v72 = vld [vmem:[%s0 + $0x1d0] sm:$0xff]
    %v73 = vld [vmem:[%s0 + $0x1d8] sm:$0xff]
    %v74 = vld [vmem:[%s0 + $0x1e0] sm:$0xff]
    %v75 = vld [vmem:[%s0 + $0x1e8] sm:$0xff]
    %v76 = vld [vmem:[%s0 + $0x1f0] sm:$0xff]
    %v77 = vld [vmem:[%s0 + $0x1f8] sm:$0xff]
    %78 = vmatprep.subr.mxu0 %v45
    %79 = vmatpush1.msra.mxu0 %v44
    %80 = vmatprep.subr.mxu0 %v43
    %81 = vmatpush1.msra.mxu0 %v42
    %82 = vmatprep.subr.mxu0 %v41
    %83 = vmatpush1.msra.mxu0 %v40
    %84 = vmatprep.subr.mxu0 %v39
    %85 = vmatpush1.msra.mxu0 %v38
    %86 = vmatprep.subr.mxu0 %v37
    %87 = vmatpush1.msra.mxu0 %v36
    %88 = vmatprep.subr.mxu0 %v35
    %89 = vmatpush1.msra.mxu0 %v34
    %90 = vmatprep.subr.mxu0 %v33
    %91 = vmatpush1.msra.mxu0 %v32
    %92 = vmatprep.subr.mxu0 %v31
    %93 = vmatpush1.msra.mxu0 %v30
    %94 = vmatprep.subr.mxu0 %v29
    %95 = vmatpush1.msra.mxu0 %v28
    %96 = vmatprep.subr.mxu0 %v27
    %97 = vmatpush1.msra.mxu0 %v26
    %98 = vmatprep.subr.mxu0 %v25
    %99 = vmatpush1.msra.mxu0 %v24
    %100 = vmatprep.subr.mxu0 %v23
    %101 = vmatpush1.msra.mxu0 %v22
    %102 = vmatprep.subr.mxu0 %v21
    %103 = vmatpush1.msra.mxu0 %v20
    %104 = vmatprep.subr.mxu0 %v19
    %105 = vmatpush1.msra.mxu0 %v18
    %106 = vmatprep.subr.mxu0 %v17
    %107 = vmatpush1.msra.mxu0 %v16
    %108 = vmatprep.subr.mxu0 %v15
    %109 = vmatpush1.msra.mxu0 %v14
    %110 = vmatprep.subr.mxu0 %v77
    %111 = vmatpush2.msra.mxu0 %v76
    %112 = vmatprep.subr.mxu0 %v75
    %113 = vmatpush2.msra.mxu0 %v74
    %114 = vmatprep.subr.mxu0 %v73
    %115 = vmatpush2.msra.mxu0 %v72
    %116 = vmatprep.subr.mxu0 %v71
    %117 = vmatpush2.msra.mxu0 %v70
    %118 = vmatprep.subr.mxu0 %v69
    %119 = vmatpush2.msra.mxu0 %v68
    %120 = vmatprep.subr.mxu0 %v67
    %121 = vmatpush2.msra.mxu0 %v66
    %122 = vmatprep.subr.mxu0 %v65
    %123 = vmatpush2.msra.mxu0 %v64
    %124 = vmatprep.subr.mxu0 %v63
    %125 = vmatpush2.msra.mxu0 %v62
    %126 = vmatprep.subr.mxu0 %v61
    %127 = vmatpush2.msra.mxu0 %v60
    %128 = vmatprep.subr.mxu0 %v59
    %129 = vmatpush2.msra.mxu0 %v58
    %130 = vmatprep.subr.mxu0 %v57
    %131 = vmatpush2.msra.mxu0 %v56
    %132 = vmatprep.subr.mxu0 %v55
    %133 = vmatpush2.msra.mxu0 %v54
    %134 = vmatprep.subr.mxu0 %v53
    %135 = vmatpush2.msra.mxu0 %v52
    %136 = vmatprep.subr.mxu0 %v51
    %137 = vmatpush2.msra.mxu0 %v50
    %138 = vmatprep.subr.mxu0 %v49
    %139 = vmatpush2.msra.mxu0 %v48
    %140 = vmatprep.subr.mxu0 %v47
    %141 = vmatpush2.msra.mxu0 %v46
    %142 = vmatprep.mubr.f32.mxu0 %v13
    %143 = vmatmul.mubr.f32.gmra.mxu0 %v12
    %v144 = vpop.f32.mrf.mxu0
    %v145 = vadd.f32 0.0, %v144
    %v146 = vpop.f32.mrf.mxu0
    %v147 = vadd.f32 0.0, %v146
    %148 = vdwg.mxu0
    %149 = vst [vmem:[#allocation2] sm:$0xff] %v145
    %vm150 = vcmask 523264
    %151 = vst.msk [vmem:[#allocation2 + $0x8] sm:$0xff] %vm150, %v147
    // Predicated region
    $region10: #{tpu_custom_call.1} parent=1 // pred_check
      _
    $region11: #{tpu_custom_call.1} parent=1 // pred_check_branch
      %153 = sbr.rel (0) target = $region13
    $region12: #{tpu_custom_call.1} parent=1 // pred_region
      %s155 = ssub.s32 256, 256
      %156 = vsyncadd [#allocation3], %s155
      %s158 = sshll.u32 [#allocation2], 4
      %s159 = int_to_ptr.vmem [resolvable:$true] %s158
      %161 = dma.vmem_to_hbm [thread:$0]  %s159, 256, %s2, [#allocation3]
    $region13: #{tpu_custom_call.1} parent=1 // pred_fallthru
      _
    // Predicated region
    $region14: #{tpu_custom_call.1} parent=1 // pred_check
      _
    $region15: #{tpu_custom_call.1} parent=1 // pred_check_branch
      %163 = sbr.rel (0) target = $region17
    $region16: #{tpu_custom_call.1} parent=1 // pred_region
      %164 = dma.done [#allocation3], 256
    $region17: #{tpu_custom_call.1} parent=1 // pred_fallthru
      _
    %165 = vsyncpa [#allocation3], 1

</llo_original>
